<compile_context>
chip_gen: v6e
topology: v6e:2x2x1
jax: 0.10.0
libtpu: 0.0.40
codegen_flags: <defaults>
</compile_context>

<pallas_src>
import jax
import jax.numpy as jnp
from jax.experimental import pallas as pl
from jax.experimental.pallas import tpu as pltpu

# --- "opt" hyper-parameters ------------------------------------------------------
NCE_T = 0.07
BATCH_SIZE = 2
NCE_INCLUDES_ALL_NEGATIVES_FROM_MINIBATCH = False  # -> batch_dim_for_bmm = BATCH_SIZE
_MASK_FILL = -10.0                                 # torch masked_fill_ value


def _patch_nce_kernel(q_ref, k_ref, loss_ref):
    # q_ref / k_ref block: (1, P, D) f32 ; loss_ref block: (1, 1, P) f32 (lane-dense)
    q = q_ref[0]                      # (P, D)
    k = k_ref[0]                      # (P, D)
    P = q.shape[0]

    # Fold 1/nce_T into q once (P*D multiplies instead of scaling P*(P+1) logits).
    qs = q * jnp.float32(1.0 / NCE_T)                                  # (P, D)

    # Similarity matrix on the MXU, contracting the feature dim of BOTH operands
    # (no explicit k.T relayout).  Orientation: sT[j, i] = k_j . qs_i, so the
    # per-query softmax reductions run over axis 0 and give lane-dense (1, P) rows.
    sT = jax.lax.dot_general(
        k, qs,
        dimension_numbers=(((1,), (1,)), ((), ())),
        preferred_element_type=jnp.float32,
    )                                                                  # (P, P), /T

    row = jax.lax.broadcasted_iota(jnp.int32, (P, P), 0)
    col = jax.lax.broadcasted_iota(jnp.int32, (P, P), 1)
    diag = row == col

    # Positive logits (already /T): diagonal of sT, as a (1, P) row.
    l_pos = jnp.sum(jnp.where(diag, sT, 0.0), axis=0, keepdims=True)   # (1, P)

    # masked_fill_ of the diagonal with -10.0 (value already divided by T).
    neg = jnp.where(diag, jnp.float32(_MASK_FILL / NCE_T), sT)         # (P, P)

    # CrossEntropy(cat([l_pos, neg], 1), target=0) without the concat:
    #   m    = max(rowmax(neg), l_pos)
    #   lse  = m + log(exp(l_pos - m) + sum_j exp(neg_j - m))
    #   loss = lse - l_pos
    m = jnp.maximum(jnp.max(neg, axis=0, keepdims=True), l_pos)        # (1, P)
    denom = jnp.exp(l_pos - m) + jnp.sum(jnp.exp(neg - m), axis=0, keepdims=True)
    loss = m + jnp.log(denom) - l_pos                                  # (1, P)

    loss_ref[...] = loss[None]                                         # (1, 1, P)


def patch_nce_loss(feat_q, feat_k):
    """feat_q, feat_k: (num_patches, dim) float32 -> per-patch loss (num_patches,)."""
    num_patches, dim = feat_q.shape
    b = 1 if NCE_INCLUDES_ALL_NEGATIVES_FROM_MINIBATCH else BATCH_SIZE
    assert num_patches % b == 0, "num_patches must be divisible by batch_size"
    p = num_patches // b

    q3 = feat_q.astype(jnp.float32).reshape(b, p, dim)
    k3 = jax.lax.stop_gradient(feat_k).astype(jnp.float32).reshape(b, p, dim)  # .detach()

    # Scoped-VMEM budget: 2 double-buffered (p, dim) f32 inputs + lane-dense output
    # + ~3 (p, p) f32 intermediates (logits, exp, mask headroom), with 2x margin.
    vmem_needed = 2 * (2 * p * dim * 4) + 2 * p * 4 + 3 * p * p * 4
    vmem_limit = int(min(max(2 * vmem_needed, 32 * 1024 * 1024), 64 * 1024 * 1024))
    # TODO(synk): for large P (>~2k) the full PxP f32 tile exceeds v7x VMEM; switch to
    # a q-row-tiled online-softmax (flash-style) grid instead of one slab per batch.

    loss3 = pl.pallas_call(
        _patch_nce_kernel,
        out_shape=jax.ShapeDtypeStruct((b, 1, p), jnp.float32),
        grid_spec=pl.GridSpec(
            grid=(b,),
            in_specs=[
                pl.BlockSpec((1, p, dim), lambda i: (i, 0, 0)),
                pl.BlockSpec((1, p, dim), lambda i: (i, 0, 0)),
            ],
            out_specs=pl.BlockSpec((1, 1, p), lambda i: (i, 0, 0)),
        ),
        compiler_params=pltpu.CompilerParams(
            dimension_semantics=("parallel",),
            vmem_limit_bytes=vmem_limit,
        ),
    )(q3, k3)

    # TODO(synk): forward-only; wrap in jax.custom_vjp if gradients w.r.t. feat_q are needed.
    return loss3.reshape(num_patches)


def _reference(feat_q, feat_k):
    """Pure-JAX reference mirroring the PyTorch forward, for verification."""
    num_patches, dim = feat_q.shape
    feat_k = jax.lax.stop_gradient(feat_k)
    l_pos = jnp.sum(feat_q * feat_k, axis=1, keepdims=True)
    b = 1 if NCE_INCLUDES_ALL_NEGATIVES_FROM_MINIBATCH else BATCH_SIZE
    q3 = feat_q.reshape(b, -1, dim)
    k3 = feat_k.reshape(b, -1, dim)
    p = q3.shape[1]
    l_neg = jnp.einsum("bpd,bqd->bpq", q3, k3)
    eye = jnp.eye(p, dtype=bool)[None]
    l_neg = jnp.where(eye, _MASK_FILL, l_neg).reshape(-1, p)
    out = jnp.concatenate([l_pos, l_neg], axis=1) / NCE_T
    lse = jax.scipy.special.logsumexp(out, axis=1)
    return lse - out[:, 0]


if __name__ == "__main__":
    key = jax.random.PRNGKey(0)
    kq, kk = jax.random.split(key)

    B, P, D = BATCH_SIZE, 8, 32            # num_patches = B * P = 16
    feat_q = jax.random.normal(kq, (B * P, D), dtype=jnp.float32)
    feat_k = jax.random.normal(kk, (B * P, D), dtype=jnp.float32)

    loss = patch_nce_loss(feat_q, feat_k)
    loss = jax.block_until_ready(loss)

    ref = _reference(feat_q, feat_k)
    assert loss.shape == (B * P,)
    assert jnp.allclose(loss, ref, rtol=1e-4, atol=1e-4), (loss, ref)

    print("KERNEL_OK")
</pallas_src>

<mosaic_0001>
module attributes {stable_mosaic.version = 11 : i64} {
  func.func @_patch_nce_kernel(%arg0: i32, %arg1: memref<1x8x32xf32, #tpu.memory_space<vmem>>, %arg2: memref<1x8x32xf32, #tpu.memory_space<vmem>>, %arg3: memref<1x1x8xf32, #tpu.memory_space<vmem>>) attributes {dimension_semantics = [#tpu.dimension_semantics<parallel>], iteration_bounds = array<i64: 2>, scalar_prefetch = 0 : i64, scratch_operands = 0 : i64, tpu.core_type = #tpu.core_type<tc>, window_params = [{transform_indices = @transform_0, window_bounds = array<i64: 1, 8, 32>}, {transform_indices = @transform_1, window_bounds = array<i64: 1, 8, 32>}, {transform_indices = @transform_2, window_bounds = array<i64: 1, 1, 8>}]} {
    %c0 = arith.constant 0 : index
    %c0_0 = arith.constant 0 : index
    %c0_1 = arith.constant 0 : index
    %0 = vector.load %arg1[%c0, %c0_0, %c0_1] : memref<1x8x32xf32, #tpu.memory_space<vmem>>, vector<1x8x32xf32>
    %1 = vector.shape_cast %0 : vector<1x8x32xf32> to vector<8x32xf32>
    %c0_2 = arith.constant 0 : index
    %c0_3 = arith.constant 0 : index
    %c0_4 = arith.constant 0 : index
    %2 = vector.load %arg2[%c0_2, %c0_3, %c0_4] : memref<1x8x32xf32, #tpu.memory_space<vmem>>, vector<1x8x32xf32>
    %3 = vector.shape_cast %2 : vector<1x8x32xf32> to vector<8x32xf32>
    %cst = arith.constant 14.2857141 : f32
    %4 = vector.broadcast %cst : f32 to vector<8x32xf32>
    %5 = arith.mulf %1, %4 : vector<8x32xf32>
    %cst_5 = arith.constant dense<0.000000e+00> : vector<8x8xf32>
    %6 = tpu.matmul %3, %5, %cst_5 {dimension_numbers = #tpu.dot_dimension_numbers<[1], [1], [0], [0], [0, 0, 1, 0], [], []>} : vector<8x32xf32>, vector<8x32xf32>, vector<8x8xf32> -> vector<8x8xf32>
    %7 = tpu.iota {dimensions = array<i32: 0>} : vector<8x8xi32>
    %8 = tpu.iota {dimensions = array<i32: 1>} : vector<8x8xi32>
    %9 = arith.cmpi eq, %7, %8 : vector<8x8xi32>
    %cst_6 = arith.constant 0.000000e+00 : f32
    %10 = vector.broadcast %cst_6 : f32 to vector<8x8xf32>
    %11 = arith.select %9, %6, %10 : vector<8x8xi1>, vector<8x8xf32>
    %cst_7 = arith.constant dense<0.000000e+00> : vector<8xf32>
    %12 = vector.multi_reduction <add>, %11, %cst_7 [0] : vector<8x8xf32> to vector<8xf32>
    %13 = vector.shape_cast %12 : vector<8xf32> to vector<1x8xf32>
    %cst_8 = arith.constant -142.857147 : f32
    %14 = vector.broadcast %cst_8 : f32 to vector<8x8xf32>
    %15 = arith.select %9, %14, %6 : vector<8x8xi1>, vector<8x8xf32>
    %cst_9 = arith.constant dense<0xFF800000> : vector<8xf32>
    %16 = vector.multi_reduction <maximumf>, %15, %cst_9 [0] : vector<8x8xf32> to vector<8xf32>
    %17 = vector.shape_cast %16 : vector<8xf32> to vector<1x8xf32>
    %18 = arith.maximumf %17, %13 : vector<1x8xf32>
    %19 = arith.subf %13, %18 : vector<1x8xf32>
    %20 = math.exp %19 : vector<1x8xf32>
    %21 = vector.broadcast %18 : vector<1x8xf32> to vector<8x8xf32>
    %22 = arith.subf %15, %21 : vector<8x8xf32>
    %23 = math.exp %22 : vector<8x8xf32>
    %cst_10 = arith.constant dense<0.000000e+00> : vector<8xf32>
    %24 = vector.multi_reduction <add>, %23, %cst_10 [0] : vector<8x8xf32> to vector<8xf32>
    %25 = vector.shape_cast %24 : vector<8xf32> to vector<1x8xf32>
    %26 = arith.addf %20, %25 : vector<1x8xf32>
    %27 = math.log %26 : vector<1x8xf32>
    %28 = arith.addf %18, %27 : vector<1x8xf32>
    %29 = arith.subf %28, %13 : vector<1x8xf32>
    %30 = vector.shape_cast %29 : vector<1x8xf32> to vector<1x1x8xf32>
    %c0_11 = arith.constant 0 : index
    %c0_12 = arith.constant 0 : index
    %c0_13 = arith.constant 0 : index
    %31 = vector.load %arg3[%c0_11, %c0_12, %c0_13] : memref<1x1x8xf32, #tpu.memory_space<vmem>>, vector<1x1x8xf32>
    tpu.vector_store %arg3[%c0_11, %c0_12, %c0_13], %30 {strides = array<i32>} : memref<1x1x8xf32, #tpu.memory_space<vmem>>, vector<1x1x8xf32>,
    return
  }
  func.func @transform_0(%arg0: i32) -> (i32, i32, i32) {
    %c0_i32 = arith.constant 0 : i32
    %c0_i32_0 = arith.constant 0 : i32
    %c0_i32_1 = arith.constant 0 : i32
    return %arg0, %c0_i32, %c0_i32_0 : i32, i32, i32
  }
  func.func @transform_1(%arg0: i32) -> (i32, i32, i32) {
    %c0_i32 = arith.constant 0 : i32
    %c0_i32_0 = arith.constant 0 : i32
    %c0_i32_1 = arith.constant 0 : i32
    return %arg0, %c0_i32, %c0_i32_0 : i32, i32, i32
  }
  func.func @transform_2(%arg0: i32) -> (i32, i32, i32) {
    %c0_i32 = arith.constant 0 : i32
    %c0_i32_0 = arith.constant 0 : i32
    %c0_i32_1 = arith.constant 0 : i32
    return %arg0, %c0_i32, %c0_i32_0 : i32, i32, i32
  }
}

</mosaic_0001>

<llo_original>
// kernel: tpu_custom_call.1
$region0: #{tpu_custom_call.1}
  #allocation0 [shape = 'u32[]', space=smem, size = 0x4, offset = 0x4, fixed_abs, tag = 'smem constant byte address 0x4 - core index']
  #allocation1 [shape = 'u32[144,128]{1,0:T(1,128)}', space=vmem, size = 0x12000, scoped, tag = 'internal scratch']
  %s0 = inlined_call_operand.hbm [shape: f32[2,8,32], index: 0, kind: input, shape index: {}]
  %s1 = inlined_call_operand.hbm [shape: f32[2,8,32], index: 1, kind: input, shape index: {}]
  %s2 = inlined_call_operand.hbm [shape: f32[2,1,8], index: 2, kind: output, shape index: {}]
  %s3 = sld [smem:[#allocation0]]
  $region49: #{tpu_custom_call.1} parent=0
    _
  %s5 = ssub.s32 1, %s3
  %s6 = scalar_select 0, %s5, %s3
  $region1: #{tpu_custom_call.1} parent=0
    #allocation2 [shape = 'u8[8192]{0}', space=vmem, size = 0x2000, scoped, tag = 'input window, operand 0']
    #allocation3 [shape = 's32[2]{0}', space=sflag, size = 0x8, scoped, tag = 'scoped memory for tpu_custom_call.1']
    #allocation4 [shape = 's32[2]{0}', space=sflag, size = 0x8, scoped, tag = 'scoped memory for tpu_custom_call.1']
    #allocation5 [shape = 'u8[8192]{0}', space=vmem, size = 0x2000, scoped, tag = 'input window, operand 1']
    #allocation6 [shape = 's32[2]{0}', space=sflag, size = 0x8, scoped, tag = 'scoped memory for tpu_custom_call.1']
    #allocation7 [shape = 'u8[1024]{0}', space=vmem, size = 0x400, scoped, tag = 'output window, operand 0']
    %7 = vsyncpa [#allocation3], 0
    %s8 = scalar_lea.sflag [#allocation3], 1
    %9 = vsyncpa %s8, 0
    %10 = vsyncpa [#allocation6], 0
    %s11 = scalar_lea.sflag [#allocation6], 1
    %12 = vsyncpa %s11, 0
    %13 = vsyncpa [#allocation4], 0
    %s14 = scalar_lea.sflag [#allocation4], 1
    %15 = vsyncpa %s14, 0
    loop: start=0, step=1, limit=4
    $region2: #{tpu_custom_call.1} parent=1 // loop_pre_header
      _
    $region3: #{tpu_custom_call.1} parent=1 // loop_header
      %s17 = sphi 0, %s21
      %p18 = scmp.ge.s32.totalorder %s17, 4
      %s27 = sphi 0, %s29
      %s30 = sphi 0, %s27
      %s31 = sphi 0, %s30
      %s47 = sphi 0, %s31
      %s53 = sphi 0, %s55
      %s56 = sphi 0, %s53
      %s57 = sphi 0, %s56
      %s73 = sphi 0, %s57
      %s79 = sphi 0, %s81
      %s82 = sphi 0, %s79
      %s83 = sphi 0, %s82
      %s99 = sphi 0, %s83
    $region4: #{tpu_custom_call.1} parent=1 // loop_header_branch
      %20 = sbr.rel (%p18) target = $region8
    $region5: #{tpu_custom_call.1} parent=1 // loop_body
      %s22 = ssub.s32 %s17, 1
      %s23 = ssub.s32 %s17, 2
      %s24 = sadd.s32 %s17, 1
      %s25 = ssub.s32 %s17, %s24
      %p26 = scmp.eq.s32.totalorder %s25, 0
      %s28 = sadd.s32 %s27, 1
      %s29 = scalar_select %p26, %s27, %s28
      %p32 = pneg %p26
      %p33 = scmp.eq.s32.totalorder %s17, 1
      %p34 = por %p32, %p33
      %p35 = scmp.ne.s32.totalorder %s27, %s30
      %p36 = scmp.eq.s32.totalorder %s17, 0
      %p37 = por %p35, %p36
      %p38 = scmp.ne.s32.totalorder %s27, %s30
      %p39 = scmp.eq.s32.totalorder %s22, 1
      %p40 = por %p38, %p39
      %p41 = scmp.ne.s32.totalorder %s30, %s31
      %p42 = scmp.eq.s32.totalorder %s22, 0
      %p43 = por %p41, %p42
      %p44 = scmp.ne.s32.totalorder %s30, %s31
      %p45 = scmp.eq.s32.totalorder %s23, 1
      %p46 = por %p44, %p45
      %p48 = scmp.ne.s32.totalorder %s31, %s47
      %p49 = scmp.eq.s32.totalorder %s23, 0
      %p50 = por %p48, %p49
      %s51 = ssub.s32 %s17, %s24
      %p52 = scmp.eq.s32.totalorder %s51, 0
      %s54 = sadd.s32 %s53, 1
      %s55 = scalar_select %p52, %s53, %s54
      %p58 = pneg %p52
      %p59 = scmp.eq.s32.totalorder %s17, 1
      %p60 = por %p58, %p59
      %p61 = scmp.ne.s32.totalorder %s53, %s56
      %p62 = scmp.eq.s32.totalorder %s17, 0
      %p63 = por %p61, %p62
      %p64 = scmp.ne.s32.totalorder %s53, %s56
      %p65 = scmp.eq.s32.totalorder %s22, 1
      %p66 = por %p64, %p65
      %p67 = scmp.ne.s32.totalorder %s56, %s57
      %p68 = scmp.eq.s32.totalorder %s22, 0
      %p69 = por %p67, %p68
      %p70 = scmp.ne.s32.totalorder %s56, %s57
      %p71 = scmp.eq.s32.totalorder %s23, 1
      %p72 = por %p70, %p71
      %p74 = scmp.ne.s32.totalorder %s57, %s73
      %p75 = scmp.eq.s32.totalorder %s23, 0
      %p76 = por %p74, %p75
      %s77 = ssub.s32 %s17, %s24
      %p78 = scmp.eq.s32.totalorder %s77, 0
      %s80 = sadd.s32 %s79, 1
      %s81 = scalar_select %p78, %s79, %s80
      %p84 = pneg %p78
      %p85 = scmp.eq.s32.totalorder %s17, 1
      %p86 = por %p84, %p85
      %p87 = scmp.ne.s32.totalorder %s79, %s82
      %p88 = scmp.eq.s32.totalorder %s17, 0
      %p89 = por %p87, %p88
      %p90 = scmp.ne.s32.totalorder %s79, %s82
      %p91 = scmp.eq.s32.totalorder %s22, 1
      %p92 = por %p90, %p91
      %p93 = scmp.ne.s32.totalorder %s82, %s83
      %p94 = scmp.eq.s32.totalorder %s22, 0
      %p95 = por %p93, %p94
      %p96 = scmp.ne.s32.totalorder %s82, %s83
      %p97 = scmp.eq.s32.totalorder %s23, 1
      %p98 = por %p96, %p97
      %p100 = scmp.ne.s32.totalorder %s83, %s99
      %p101 = scmp.eq.s32.totalorder %s23, 0
      %p102 = por %p100, %p101
      %p103 = scmp.le.s32.totalorder 1, %s17
      %p104 = scmp.lt.s32.totalorder %s17, 3
      %p105 = pnand %p103, %p104
      %p106 = pneg %p105
      // Predicated region
      $region9: #{tpu_custom_call.1} parent=5 // pred_check
        _
      $region10: #{tpu_custom_call.1} parent=5 // pred_check_branch
        %108 = sbr.rel (%p105) target = $region12
      $region11: #{tpu_custom_call.1} parent=5 // pred_region
        %s109 = ssub.s32 %s17, 1
      $region12: #{tpu_custom_call.1} parent=5 // pred_fallthru
        _
      %p110 = scmp.lt.s32.totalorder %s17, 2
      // Predicated region
      $region13: #{tpu_custom_call.1} parent=5 // pred_check
        %p111 = pneg %p110
      $region14: #{tpu_custom_call.1} parent=5 // pred_check_branch
        %113 = sbr.rel (%p111) target = $region16
      $region15: #{tpu_custom_call.1} parent=5 // pred_region
        // Predicated region
        $region17: #{tpu_custom_call.1} parent=15 // pred_check
          %p114 = pneg %p37
        $region18: #{tpu_custom_call.1} parent=15 // pred_check_branch
          %116 = sbr.rel (%p114) target = $region20
        $region19: #{tpu_custom_call.1} parent=15 // pred_region
          %s117 = sand.u32 %s27, 1
          %s118 = scalar_lea.sflag [#allocation3], %s117
          %s119 = sand.u32 %s27, 1
          %s120 = smul.addr %s119, 8
          %s121 = scalar_lea.vmem [#allocation2], %s120
          %s123 = ssub.s32 128, 128
          %124 = vsyncadd %s118, %s123
          %s125 = smul.addr %s17, 128
          %s126 = scalar_lea.hbm %s0, %s125
          %s128 = sshll.u32 %s121, 4
          %s129 = int_to_ptr.vmem [resolvable:$true] %s128
          %131 = dma.hbm_to_vmem [thread:$0]  %s126, 128, %s129, %s118
        $region20: #{tpu_custom_call.1} parent=15 // pred_fallthru
          _
        // Predicated region
        $region21: #{tpu_custom_call.1} parent=15 // pred_check
          %p132 = pneg %p63
        $region22: #{tpu_custom_call.1} parent=15 // pred_check_branch
          %134 = sbr.rel (%p132) target = $region24
        $region23: #{tpu_custom_call.1} parent=15 // pred_region
          %s135 = sand.u32 %s53, 1
          %s136 = scalar_lea.sflag [#allocation6], %s135
          %s137 = sand.u32 %s53, 1
          %s138 = smul.addr %s137, 8
          %s139 = scalar_lea.vmem [#allocation5], %s138
          %s141 = ssub.s32 128, 128
          %142 = vsyncadd %s136, %s141
          %s143 = smul.addr %s17, 128
          %s144 = scalar_lea.hbm %s1, %s143
          %s146 = sshll.u32 %s139, 4
          %s147 = int_to_ptr.vmem [resolvable:$true] %s146
          %149 = dma.hbm_to_vmem [thread:$0]  %s144, 128, %s147, %s136
        $region24: #{tpu_custom_call.1} parent=15 // pred_fallthru
          _
      $region16: #{tpu_custom_call.1} parent=5 // pred_fallthru
        _
      %p150 = scmp.le.s32.totalorder 1, %s17
      %p151 = scmp.lt.s32.totalorder %s17, 3
      %p152 = pnand %p150, %p151
      %p153 = pneg %p152
      // Predicated region
      $region25: #{tpu_custom_call.1} parent=5 // pred_check
        _
      $region26: #{tpu_custom_call.1} parent=5 // pred_check_branch
        %155 = sbr.rel (%p152) target = $region28
      $region27: #{tpu_custom_call.1} parent=5 // pred_region
        %s156 = ssub.s32 %s17, 1
        %s157 = sand.u32 %s30, 1
        %s158 = scalar_lea.sflag [#allocation3], %s157
        %s159 = sand.u32 %s30, 1
        %s160 = smul.addr %s159, 8
        %s161 = scalar_lea.vmem [#allocation2], %s160
        // Predicated region
        $region29: #{tpu_custom_call.1} parent=27 // pred_check
          %p162 = pneg %p43
        $region30: #{tpu_custom_call.1} parent=27 // pred_check_branch
          %164 = sbr.rel (%p162) target = $region32
        $region31: #{tpu_custom_call.1} parent=27 // pred_region
          %165 = dma.done %s158, 128
        $region32: #{tpu_custom_call.1} parent=27 // pred_fallthru
          _
        %s166 = sand.u32 %s56, 1
        %s167 = scalar_lea.sflag [#allocation6], %s166
        %s168 = sand.u32 %s56, 1
        %s169 = smul.addr %s168, 8
        %s170 = scalar_lea.vmem [#allocation5], %s169
        // Predicated region
        $region33: #{tpu_custom_call.1} parent=27 // pred_check
          %p171 = pneg %p69
        $region34: #{tpu_custom_call.1} parent=27 // pred_check_branch
          %173 = sbr.rel (%p171) target = $region36
        $region35: #{tpu_custom_call.1} parent=27 // pred_region
          %174 = dma.done %s167, 128
        $region36: #{tpu_custom_call.1} parent=27 // pred_fallthru
          _
        %s175 = sand.u32 %s30, 1
        %s176 = scalar_lea.sflag [#allocation3], %s175
        %s177 = sand.u32 %s30, 1
        %s178 = smul.addr %s177, 8
        %s179 = scalar_lea.vmem [#allocation2], %s178
        %p180 = pneg %p43
        %p181 = pneg %p40
        %s182 = sand.u32 %s56, 1
        %s183 = scalar_lea.sflag [#allocation6], %s182
        %s184 = sand.u32 %s56, 1
        %s185 = smul.addr %s184, 8
        %s186 = scalar_lea.vmem [#allocation5], %s185
        %p187 = pneg %p69
        %p188 = pneg %p66
        %p189 = pneg %p95
        %p190 = pneg %p92
        %s191 = sand.u32 %s82, 1
        %s192 = scalar_lea.sflag [#allocation4], %s191
        %s193 = sand.u32 %s82, 1
        %s194 = scalar_lea.vmem [#allocation7], %s193
        %v195 = vld [vmem:[%s161] sm:$0xff]
        %v196 = vld [vmem:[%s170] sm:$0xff]
        %v197 = vmul.f32 %v195, 14.285714
        %vm198 = vcmask 261120
        %v200 = vsel %vm198, %v196, 0
        %v203 = vsel %vm198, %v197, 0
        %205 = vmatprep.subr.mxu0 0.0
        %206 = vmatpush1.xpose.msra.mxu0 0.0
        %207 = vmatprep.subr.mxu0 0.0
        %208 = vmatpush1.xpose.msra.mxu0 0.0
        %209 = vmatprep.subr.mxu0 0.0
        %210 = vmatpush1.xpose.msra.mxu0 0.0
        %211 = vmatprep.subr.mxu0 0.0
        %212 = vmatpush1.xpose.msra.mxu0 0.0
        %213 = vmatprep.subr.mxu0 0.0
        %214 = vmatpush1.xpose.msra.mxu0 0.0
        %215 = vmatprep.subr.mxu0 0.0
        %216 = vmatpush1.xpose.msra.mxu0 0.0
        %217 = vmatprep.subr.mxu0 0.0
        %218 = vmatpush1.xpose.msra.mxu0 0.0
        %219 = vmatprep.subr.mxu0 0.0
        %220 = vmatpush1.xpose.msra.mxu0 0.0
        %221 = vmatprep.subr.mxu0 0.0
        %222 = vmatpush1.xpose.msra.mxu0 0.0
        %223 = vmatprep.subr.mxu0 0.0
        %224 = vmatpush1.xpose.msra.mxu0 0.0
        %225 = vmatprep.subr.mxu0 0.0
        %226 = vmatpush1.xpose.msra.mxu0 0.0
        %227 = vmatprep.subr.mxu0 0.0
        %228 = vmatpush1.xpose.msra.mxu0 0.0
        %229 = vmatprep.subr.mxu0 0.0
        %230 = vmatpush1.xpose.msra.mxu0 0.0
        %231 = vmatprep.subr.mxu0 0.0
        %232 = vmatpush1.xpose.msra.mxu0 0.0
        %233 = vmatprep.subr.mxu0 0.0
        %234 = vmatpush1.xpose.msra.mxu0 0.0
        %235 = vmatprep.subr.mxu0 0.0
        %236 = vmatpush1.xpose.msra.mxu0 %v203
        %237 = vmatprep.subr.mxu0 0.0
        %238 = vmatpush2.xpose.msra.mxu0 0.0
        %239 = vmatprep.subr.mxu0 0.0
        %240 = vmatpush2.xpose.msra.mxu0 0.0
        %241 = vmatprep.subr.mxu0 0.0
        %242 = vmatpush2.xpose.msra.mxu0 0.0
        %243 = vmatprep.subr.mxu0 0.0
        %244 = vmatpush2.xpose.msra.mxu0 0.0
        %245 = vmatprep.subr.mxu0 0.0
        %246 = vmatpush2.xpose.msra.mxu0 0.0
        %247 = vmatprep.subr.mxu0 0.0
        %248 = vmatpush2.xpose.msra.mxu0 0.0
        %249 = vmatprep.subr.mxu0 0.0
        %250 = vmatpush2.xpose.msra.mxu0 0.0
        %251 = vmatprep.subr.mxu0 0.0
        %252 = vmatpush2.xpose.msra.mxu0 0.0
        %253 = vmatprep.subr.mxu0 0.0
        %254 = vmatpush2.xpose.msra.mxu0 0.0
        %255 = vmatprep.subr.mxu0 0.0
        %256 = vmatpush2.xpose.msra.mxu0 0.0
        %257 = vmatprep.subr.mxu0 0.0
        %258 = vmatpush2.xpose.msra.mxu0 0.0
        %259 = vmatprep.subr.mxu0 0.0
        %260 = vmatpush2.xpose.msra.mxu0 0.0
        %261 = vmatprep.subr.mxu0 0.0
        %262 = vmatpush2.xpose.msra.mxu0 0.0
        %263 = vmatprep.subr.mxu0 0.0
        %264 = vmatpush2.xpose.msra.mxu0 0.0
        %265 = vmatprep.subr.mxu0 0.0
        %266 = vmatpush2.xpose.msra.mxu0 0.0
        %267 = vmatprep.subr.mxu0 0.0
        %268 = vmatpush2.xpose.msra.mxu0 0.0
        %269 = vmatprep.mubr.f32.mxu0 0.0
        %270 = vmatmul.mubr.f32.gmra.mxu0 %v200
        %v271 = vpop.f32.mrf.mxu0
        %v272 = vadd.f32 0.0, %v271
        %v273 = vpop.f32.mrf.mxu0
        %274 = vdwg.mxu0
        %v275 = vlaneseq
        %v276 = vshrl.u32 %v275, 7
        %v277 = vlaneseq
        %v278 = vand.u32 %v277, 127
        %vm279 = vcmp.eq.s32.totalorder %v276, %v278
        %v280 = vsel %vm279, %v272, 0.0
        %vm281 = vcmask 64512
        %v282 = vsel %vm281, %v280, 0.0
        %v283 = vrot.slane %v282, 4
        %v284 = vadd.f32 %v282, %v283
        %v285 = vrot.slane %v284, 2
        %v286 = vadd.f32 %v284, %v285
        %v287 = vrot.slane %v286, 1
        %v288 = vadd.f32 %v286, %v287
        %v289 = vsel %vm279, -142.85715, %v272
        %v290 = vsel %vm281, %v289, -inf
        %v291 = vrot.slane %v290, 4
        %v292 = vmax.f32 %v290, %v291
        %v293 = vrot.slane %v292, 2
        %v294 = vmax.f32 %v292, %v293
        %v295 = vrot.slane %v294, 1
        %v296 = vmax.f32 %v294, %v295
        %v297 = vmax.f32 %v296, %v288
        %v298 = vsub.f32 %v288, %v297
        %v299 = vmul.f32 %v298, 1.442695
        %v300 = vpow.pop %v299
        %v301 = vsub.f32 %v289, %v297
        %v302 = vmul.f32 %v301, 1.442695
        %v303 = vpow.pop %v302
        %v304 = vsel %vm281, %v303, 0.0
        %v305 = vrot.slane %v304, 4
        %v306 = vadd.f32 %v304, %v305
        %v307 = vrot.slane %v306, 2
        %v308 = vadd.f32 %v306, %v307
        %v309 = vrot.slane %v308, 1
        %v310 = vadd.f32 %v308, %v309
        %v311 = vadd.f32 %v300, %v310
        %v312 = vlog2.pop %v311
        %v313 = vmul.f32 %v312, 0.6931472
        %v314 = vadd.f32 %v297, %v313
        %v315 = vsub.f32 %v314, %v288
        %vm316 = vcmask 57344
        %317 = vst.msk [vmem:[%s194] sm:$0x1] %vm316, %v315
        %s318 = sand.u32 %s82, 1
        %s319 = scalar_lea.sflag [#allocation4], %s318
        %s320 = sand.u32 %s82, 1
        %s321 = scalar_lea.vmem [#allocation7], %s320
        // Predicated region
        $region37: #{tpu_custom_call.1} parent=27 // pred_check
          %p322 = pneg %p92
        $region38: #{tpu_custom_call.1} parent=27 // pred_check_branch
          %324 = sbr.rel (%p322) target = $region40
        $region39: #{tpu_custom_call.1} parent=27 // pred_region
          %s326 = ssub.s32 16, 16
          %327 = vsyncadd %s319, %s326
          %s328 = smul.addr %s22, 16
          %s329 = scalar_lea.hbm %s2, %s328
          %s331 = sshll.u32 %s321, 4
          %s332 = int_to_ptr.vmem [resolvable:$true] %s331
          %334 = dma.vmem_to_hbm [thread:$0]  %s332, 16, %s329, %s319
        $region40: #{tpu_custom_call.1} parent=27 // pred_fallthru
          _
      $region28: #{tpu_custom_call.1} parent=5 // pred_fallthru
        _
      %p335 = scmp.le.s32.totalorder 2, %s17
      // Predicated region
      $region41: #{tpu_custom_call.1} parent=5 // pred_check
        %p336 = pneg %p335
      $region42: #{tpu_custom_call.1} parent=5 // pred_check_branch
        %338 = sbr.rel (%p336) target = $region44
      $region43: #{tpu_custom_call.1} parent=5 // pred_region
        %s339 = ssub.s32 %s17, 2
        // Predicated region
        $region45: #{tpu_custom_call.1} parent=43 // pred_check
          %p340 = pneg %p98
        $region46: #{tpu_custom_call.1} parent=43 // pred_check_branch
          %342 = sbr.rel (%p340) target = $region48
        $region47: #{tpu_custom_call.1} parent=43 // pred_region
          %s343 = sand.u32 %s83, 1
          %s344 = scalar_lea.sflag [#allocation4], %s343
          %s345 = sand.u32 %s83, 1
          %s346 = scalar_lea.vmem [#allocation7], %s345
          %347 = dma.done %s344, 16
        $region48: #{tpu_custom_call.1} parent=43 // pred_fallthru
          _
      $region44: #{tpu_custom_call.1} parent=5 // pred_fallthru
        _
    $region6: #{tpu_custom_call.1} parent=1 // loop_footer
      %s21 = sadd.s32 1, %s17
    $region7: #{tpu_custom_call.1} parent=1 // loop_footer_branch
      %16 = sbr.rel target = $region3
    $region8: #{tpu_custom_call.1} parent=1 // loop_exit
      _
    %348 = vsyncpa [#allocation3], 1
    %s349 = scalar_lea.sflag [#allocation3], 1
    %350 = vsyncpa %s349, 1
    %351 = vsyncpa [#allocation6], 1
    %s352 = scalar_lea.sflag [#allocation6], 1
    %353 = vsyncpa %s352, 1
    %354 = vsyncpa [#allocation4], 1
    %s355 = scalar_lea.sflag [#allocation4], 1
    %356 = vsyncpa %s355, 1

</llo_original>
